<compile_context>
chip_gen: v7x
topology: tpu7x:2x2x1
jax: 0.10.0
libtpu: 0.0.40
codegen_flags: <defaults>
</compile_context>

<pallas_src>
import functools

import jax
import jax.numpy as jnp
from jax.experimental import pallas as pl
from jax.experimental.pallas import tpu as pltpu

_EPS = 1e-8


def _lane_group_sum(s):
    """Sum an (N, W) f32 block over 128-lane groups -> (N, 128) partial sums.

    Pairwise tree of plain vreg adds on 128-aligned lane slices (no per-step
    cross-lane XLU reduce).  For pathologically wide blocks fall back to a
    single reshaped reduce to keep the unrolled op count bounded.
    """
    n, w = s.shape
    g = w // 128
    if g > 1024:  # corner case only; keeps trace/compile size bounded
        return jnp.sum(s.reshape(n, g, 128), axis=1)
    parts = [s[:, i * 128:(i + 1) * 128] for i in range(g)]
    while len(parts) > 1:
        nxt = [parts[i] + parts[i + 1] for i in range(0, len(parts) - 1, 2)]
        if len(parts) % 2:
            nxt.append(parts[-1])
        parts = nxt
    return parts[0]


def _min_stddev_kernel(num_x_blocks, inv_D, pad_sum, x_ref, o_ref, acc_ref):
    """Grid axis c in [0, num_x_blocks]: accumulate/copy steps + 1 finalize step.

    x_ref:   (N, K*HW_pad)  K channels of x (clamped to the last block on the
             finalize step, unused there -- Pallas skips the re-fetch).
    o_ref:   (N, K*HW_pad)  matching window of the fused (N, (C+1)*HW_pad)
             output slab (the finalize window is partially out of bounds; OOB
             lanes are dropped by Pallas).
    acc_ref: (N, 128) f32   running 128-lane-grouped sum of sqrt(d^2 + eps).
    """
    c = pl.program_id(0)

    @pl.when(c == 0)
    def _init():
        acc_ref[...] = jnp.zeros_like(acc_ref)

    @pl.when(c < num_x_blocks)
    def _accumulate_and_copy():
        x = x_ref[...]                                   # native dtype
        xf = x.astype(jnp.float32)
        mean_b = jnp.mean(xf, axis=0, keepdims=True)     # per-feature batch mean
        d = xf - mean_b
        s = jnp.sqrt(d * d + _EPS)                       # EUP sqrt, off the VPU slot
        acc_ref[...] += _lane_group_sum(s)               # plain vreg adds
        o_ref[...] = x                                   # fused concat: pass x through

    @pl.when(c == num_x_blocks)
    def _finalize():
        total = jnp.sum(acc_ref[...], axis=1, keepdims=True)   # one XLU reduce total
        std = (total - pad_sum) * inv_D                         # (N, 1) per-sample scalar
        o_ref[...] = jnp.broadcast_to(std, o_ref.shape).astype(o_ref.dtype)


def _choose_channels_per_block(C, N, HW_pad, itemsize, vmem_budget_bytes):
    """Largest divisor K of C whose pipelined VMEM footprint fits the budget,
    stopping once the block is comfortably lane-dense (roofline gains saturate)."""
    best = 1
    for k in range(1, C + 1):
        if C % k:
            continue
        in_bytes = N * k * HW_pad * itemsize
        f32_bytes = N * k * HW_pad * 4
        # double-buffered input + double-buffered output + ~3 f32 temporaries
        footprint = 4 * in_bytes + 3 * f32_bytes
        if footprint > vmem_budget_bytes:
            break
        best = k
        lanes = k * HW_pad
        if lanes >= 16384 or (lanes >= 2048 and in_bytes >= (1 << 20)):
            break
    return best


def min_stddev(x):
    """x: (N, C, H, W) -> (N, C+1, H, W), matching the PyTorch MinStddev module."""
    N, C, H, W = x.shape
    HW = H * W
    HW_pad = ((HW + 127) // 128) * 128
    pad = HW_pad - HW
    D_true = C * HW
    itemsize = x.dtype.itemsize

    # Generation-aware scoped-VMEM limit: 64 MiB on v5e/v6e (128 MiB physical),
    # 48 MiB on v7x (64 MiB physical).
    try:
        vmem_cap = int(pltpu.get_tpu_info().vmem_capacity_bytes)
    except Exception:
        vmem_cap = 64 * 1024 * 1024
    vmem_limit = min(64 * 1024 * 1024, (vmem_cap * 3) // 4)

    # TODO(synk): for pathological N*HW where even K=1 exceeds the budget, tile
    #             the batch dimension as well.
    K = _choose_channels_per_block(C, N, HW_pad, itemsize, vmem_limit // 2)
    T = C // K                       # number of accumulate/copy grid steps
    W_blk = K * HW_pad
    out_dim = (C + 1) * HW_pad       # std channel is the last HW_pad columns

    if pad:
        x_flat = jnp.pad(x.reshape(N, C, HW), ((0, 0), (0, 0), (0, pad)))
        x_flat = x_flat.reshape(N, C * HW_pad)
    else:
        x_flat = x.reshape(N, C * HW_pad)

    # Each padded (all-zero) feature contributes exactly sqrt(eps) per sample.
    pad_sum = float(C * pad) * float(jnp.sqrt(jnp.float32(_EPS)))

    kernel = functools.partial(_min_stddev_kernel, T, 1.0 / D_true, pad_sum)
    out_flat = pl.pallas_call(
        kernel,
        out_shape=jax.ShapeDtypeStruct((N, out_dim), x.dtype),
        grid_spec=pltpu.PrefetchScalarGridSpec(
            num_scalar_prefetch=0,
            grid=(T + 1,),
            in_specs=[
                # Finalize step re-reads block T-1 (same block index -> Pallas
                # skips the re-fetch; the data is unused there).
                pl.BlockSpec((N, W_blk), lambda c: (0, jnp.minimum(c, T - 1))),
            ],
            out_specs=pl.BlockSpec((N, W_blk), lambda c: (0, c)),
            scratch_shapes=[pltpu.VMEM((N, 128), jnp.float32)],
        ),
        compiler_params=pltpu.CompilerParams(
            # Reduction carried across the grid axis -> must stay "arbitrary".
            dimension_semantics=("arbitrary",),
            vmem_limit_bytes=vmem_limit,
        ),
    )(x_flat)

    out = out_flat.reshape(N, C + 1, HW_pad)
    if pad:
        out = out[:, :, :HW]         # strip per-channel padding (incl. std channel)
    # Free reshape in the common aligned case: the (N, (C+1)*HW) slab is exactly
    # the row-major layout of cat([x, std_map], dim=1).
    return out.reshape(N, C + 1, H, W)


def _reference(x):
    d = x - jnp.mean(x, axis=0, keepdims=True)
    s = jnp.mean(jnp.sqrt(d * d + _EPS), axis=(1, 2, 3), keepdims=True)
    s_map = s * jnp.ones((x.shape[0], 1, x.shape[2], x.shape[3]), dtype=x.dtype)
    return jnp.concatenate([x, s_map], axis=1)


if __name__ == "__main__":
    key = jax.random.PRNGKey(0)
    k1, k2 = jax.random.split(key)

    # Main case: HW is a multiple of 128 (lane-aligned fast path).
    N, C, H, W = 2, 4, 16, 16
    x = jax.random.normal(k1, (N, C, H, W), dtype=jnp.float32)
    out = jax.block_until_ready(min_stddev(x))
    ref = _reference(x)
    assert out.shape == (N, C + 1, H, W), out.shape
    assert jnp.allclose(out, ref, atol=1e-5, rtol=1e-5), "mismatch vs reference"

    # Hardened fallback: HW not a multiple of 128 (padded path).
    x2 = jax.random.normal(k2, (2, 3, 5, 5), dtype=jnp.float32)
    out2 = jax.block_until_ready(min_stddev(x2))
    ref2 = _reference(x2)
    assert out2.shape == (2, 4, 5, 5), out2.shape
    assert jnp.allclose(out2, ref2, atol=1e-5, rtol=1e-5), "mismatch vs reference (padded)"

    print("KERNEL_OK")
</pallas_src>

<mosaic_0001>
module attributes {stable_mosaic.version = 11 : i64} {
  func.func @_min_stddev_kernel(%arg0: i32, %arg1: memref<2x1024xf32, #tpu.memory_space<vmem>>, %arg2: memref<2x1024xf32, #tpu.memory_space<vmem>>, %arg3: memref<2x128xf32, #tpu.memory_space<vmem>>) attributes {dimension_semantics = [#tpu.dimension_semantics<arbitrary>], iteration_bounds = array<i64: 2>, scalar_prefetch = 0 : i64, scratch_operands = 1 : i64, tpu.core_type = #tpu.core_type<tc>, window_params = [{transform_indices = @transform_0, window_bounds = array<i64: 2, 1024>}, {transform_indices = @transform_1, window_bounds = array<i64: 2, 1024>}]} {
    %c0_i32 = arith.constant 0 : i32
    %0 = arith.cmpi eq, %arg0, %c0_i32 : i32
    %1 = arith.extui %0 : i1 to i32
    %c0_i32_0 = arith.constant 0 : i32
    %2 = arith.cmpi ne, %1, %c0_i32_0 : i32
    scf.if %2 {
      %cst = arith.constant 0.000000e+00 : f32
      %9 = vector.broadcast %cst : f32 to vector<2x128xf32>
      %c0 = arith.constant 0 : index
      %c0_4 = arith.constant 0 : index
      %10 = vector.load %arg3[%c0, %c0_4] : memref<2x128xf32, #tpu.memory_space<vmem>>, vector<2x128xf32>
      tpu.vector_store %arg3[%c0, %c0_4], %9 {strides = array<i32>} : memref<2x128xf32, #tpu.memory_space<vmem>>, vector<2x128xf32>,
    } else {
    }
    %c1_i32 = arith.constant 1 : i32
    %3 = arith.cmpi slt, %arg0, %c1_i32 : i32
    %4 = arith.extui %3 : i1 to i32
    %c0_i32_1 = arith.constant 0 : i32
    %5 = arith.cmpi ne, %4, %c0_i32_1 : i32
    scf.if %5 {
      %c0 = arith.constant 0 : index
      %c0_4 = arith.constant 0 : index
      %9 = vector.load %arg1[%c0, %c0_4] : memref<2x1024xf32, #tpu.memory_space<vmem>>, vector<2x1024xf32>
      %cst = arith.constant dense<0.000000e+00> : vector<1024xf32>
      %10 = vector.multi_reduction <add>, %9, %cst [0] : vector<2x1024xf32> to vector<1024xf32>
      %11 = vector.shape_cast %10 : vector<1024xf32> to vector<1x1024xf32>
      %cst_5 = arith.constant 2.000000e+00 : f32
      %12 = vector.broadcast %cst_5 : f32 to vector<1x1024xf32>
      %13 = arith.divf %11, %12 : vector<1x1024xf32>
      %14 = vector.broadcast %13 : vector<1x1024xf32> to vector<2x1024xf32>
      %15 = arith.subf %9, %14 : vector<2x1024xf32>
      %16 = arith.mulf %15, %15 : vector<2x1024xf32>
      %cst_6 = arith.constant 9.99999993E-9 : f32
      %17 = vector.broadcast %cst_6 : f32 to vector<2x1024xf32>
      %18 = arith.addf %16, %17 : vector<2x1024xf32>
      %19 = math.sqrt %18 : vector<2x1024xf32>
      %c0_7 = arith.constant 0 : index
      %c0_8 = arith.constant 0 : index
      %20 = vector.load %arg3[%c0_7, %c0_8] : memref<2x128xf32, #tpu.memory_space<vmem>>, vector<2x128xf32>
      %21 = vector.extract_strided_slice %19 {offsets = [0, 0], sizes = [2, 128], strides = [1, 1]} : vector<2x1024xf32> to vector<2x128xf32>
      %22 = vector.extract_strided_slice %19 {offsets = [0, 128], sizes = [2, 128], strides = [1, 1]} : vector<2x1024xf32> to vector<2x128xf32>
      %23 = vector.extract_strided_slice %19 {offsets = [0, 256], sizes = [2, 128], strides = [1, 1]} : vector<2x1024xf32> to vector<2x128xf32>
      %24 = vector.extract_strided_slice %19 {offsets = [0, 384], sizes = [2, 128], strides = [1, 1]} : vector<2x1024xf32> to vector<2x128xf32>
      %25 = vector.extract_strided_slice %19 {offsets = [0, 512], sizes = [2, 128], strides = [1, 1]} : vector<2x1024xf32> to vector<2x128xf32>
      %26 = vector.extract_strided_slice %19 {offsets = [0, 640], sizes = [2, 128], strides = [1, 1]} : vector<2x1024xf32> to vector<2x128xf32>
      %27 = vector.extract_strided_slice %19 {offsets = [0, 768], sizes = [2, 128], strides = [1, 1]} : vector<2x1024xf32> to vector<2x128xf32>
      %28 = vector.extract_strided_slice %19 {offsets = [0, 896], sizes = [2, 128], strides = [1, 1]} : vector<2x1024xf32> to vector<2x128xf32>
      %29 = arith.addf %21, %22 : vector<2x128xf32>
      %30 = arith.addf %23, %24 : vector<2x128xf32>
      %31 = arith.addf %25, %26 : vector<2x128xf32>
      %32 = arith.addf %27, %28 : vector<2x128xf32>
      %33 = arith.addf %29, %30 : vector<2x128xf32>
      %34 = arith.addf %31, %32 : vector<2x128xf32>
      %35 = arith.addf %33, %34 : vector<2x128xf32>
      %36 = arith.addf %20, %35 : vector<2x128xf32>
      %c0_9 = arith.constant 0 : index
      %c0_10 = arith.constant 0 : index
      %37 = vector.load %arg3[%c0_9, %c0_10] : memref<2x128xf32, #tpu.memory_space<vmem>>, vector<2x128xf32>
      tpu.vector_store %arg3[%c0_9, %c0_10], %36 {strides = array<i32>} : memref<2x128xf32, #tpu.memory_space<vmem>>, vector<2x128xf32>,
      %c0_11 = arith.constant 0 : index
      %c0_12 = arith.constant 0 : index
      %38 = vector.load %arg2[%c0_11, %c0_12] : memref<2x1024xf32, #tpu.memory_space<vmem>>, vector<2x1024xf32>
      tpu.vector_store %arg2[%c0_11, %c0_12], %9 {strides = array<i32>} : memref<2x1024xf32, #tpu.memory_space<vmem>>, vector<2x1024xf32>,
    } else {
    }
    %c1_i32_2 = arith.constant 1 : i32
    %6 = arith.cmpi eq, %arg0, %c1_i32_2 : i32
    %7 = arith.extui %6 : i1 to i32
    %c0_i32_3 = arith.constant 0 : i32
    %8 = arith.cmpi ne, %7, %c0_i32_3 : i32
    scf.if %8 {
      %c0 = arith.constant 0 : index
      %c0_4 = arith.constant 0 : index
      %9 = vector.load %arg3[%c0, %c0_4] : memref<2x128xf32, #tpu.memory_space<vmem>>, vector<2x128xf32>
      %cst = arith.constant dense<0.000000e+00> : vector<2xf32>
      %10 = vector.multi_reduction <add>, %9, %cst [1] : vector<2x128xf32> to vector<2xf32>
      %11 = vector.shape_cast %10 : vector<2xf32> to vector<2x1xf32>
      %cst_5 = arith.constant 0.000000e+00 : f32
      %12 = vector.broadcast %cst_5 : f32 to vector<2x1xf32>
      %13 = arith.subf %11, %12 : vector<2x1xf32>
      %cst_6 = arith.constant 9.765625E-4 : f32
      %14 = vector.broadcast %cst_6 : f32 to vector<2x1xf32>
      %15 = arith.mulf %13, %14 : vector<2x1xf32>
      %16 = vector.shape_cast %15 : vector<2x1xf32> to vector<2x1xf32>
      %17 = vector.broadcast %16 : vector<2x1xf32> to vector<2x1024xf32>
      %c0_7 = arith.constant 0 : index
      %c0_8 = arith.constant 0 : index
      %18 = vector.load %arg2[%c0_7, %c0_8] : memref<2x1024xf32, #tpu.memory_space<vmem>>, vector<2x1024xf32>
      tpu.vector_store %arg2[%c0_7, %c0_8], %17 {strides = array<i32>} : memref<2x1024xf32, #tpu.memory_space<vmem>>, vector<2x1024xf32>,
    } else {
    }
    return
  }
  func.func @transform_0(%arg0: i32) -> (i32, i32) {
    %c0_i32 = arith.constant 0 : i32
    %0 = arith.minsi %arg0, %c0_i32 : i32
    %c0_i32_0 = arith.constant 0 : i32
    %c0_i32_1 = arith.constant 0 : i32
    return %c0_i32_0, %0 : i32, i32
  }
  func.func @transform_1(%arg0: i32) -> (i32, i32) {
    %c0_i32 = arith.constant 0 : i32
    %c0_i32_0 = arith.constant 0 : i32
    return %c0_i32, %arg0 : i32, i32
  }
}

</mosaic_0001>

<llo_original>
// kernel: tpu_custom_call.1
$region0: #{tpu_custom_call.1}
  #allocation0 [shape = 'u32[]', space=smem, size = 0x4, offset = 0x4, fixed_abs, tag = 'smem constant byte address 0x4 - core index']
  #allocation1 [shape = 'u32[144,128]{1,0:T(1,128)}', space=vmem, size = 0x12000, scoped, tag = 'internal scratch']
  #allocation2 [shape = 'f32[2,128]{1,0:T(2,128)}', space=vmem, size = 0x400, scoped, tag = 'scratch operand']
  %s0 = inlined_call_operand.hbm [shape: f32[2,1024], index: 0, kind: input, shape index: {}]
  %s1 = inlined_call_operand.hbm [shape: f32[2,1280], index: 1, kind: output, shape index: {}]
  %s2 = sld [smem:[#allocation0]]
  $region53: #{tpu_custom_call.1} parent=0
    _
  %s4 = ssub.s32 1, %s2
  %s5 = scalar_select 0, %s4, %s2
  $region1: #{tpu_custom_call.1} parent=0
    #allocation3 [shape = 'u8[16384]{0}', space=vmem, size = 0x4000, scoped, tag = 'input window, operand 0']
    #allocation4 [shape = 's32[2]{0}', space=sflag, size = 0x8, scoped, tag = 'scoped memory for tpu_custom_call.1']
    #allocation5 [shape = 's32[2]{0}', space=sflag, size = 0x8, scoped, tag = 'scoped memory for tpu_custom_call.1']
    #allocation6 [shape = 'u8[16384]{0}', space=vmem, size = 0x4000, scoped, tag = 'output window, operand 0']
    %6 = vsyncpa [#allocation4], 0
    %s7 = scalar_lea.sflag [#allocation4], 1
    %8 = vsyncpa %s7, 0
    %9 = vsyncpa [#allocation5], 0
    %s10 = scalar_lea.sflag [#allocation5], 1
    %11 = vsyncpa %s10, 0
    loop: start=0, step=1, limit=4
    $region2: #{tpu_custom_call.1} parent=1 // loop_pre_header
      _
    $region3: #{tpu_custom_call.1} parent=1 // loop_header
      %s13 = sphi 0, %s17
      %p14 = scmp.ge.s32.totalorder %s13, 4
      %s27 = sphi 0, %s29
      %s30 = sphi 0, %s27
      %s31 = sphi 0, %s30
      %s47 = sphi 0, %s31
      %s53 = sphi 0, %s55
      %s56 = sphi 0, %s53
      %s57 = sphi 0, %s56
      %s73 = sphi 0, %s57
    $region4: #{tpu_custom_call.1} parent=1 // loop_header_branch
      %16 = sbr.rel (%p14) target = $region8
    $region5: #{tpu_custom_call.1} parent=1 // loop_body
      %s18 = ssub.s32 %s13, 1
      %s19 = ssub.s32 %s13, 2
      %s20 = sadd.s32 %s13, 1
      %p21 = scmp.lt.s32.totalorder %s13, 0
      %s22 = scalar_select %p21, %s13, 0
      %p23 = scmp.lt.s32.totalorder %s20, 0
      %s24 = scalar_select %p23, %s20, 0
      %s25 = ssub.s32 %s22, %s24
      %p26 = scmp.eq.s32.totalorder %s25, 0
      %s28 = sadd.s32 %s27, 1
      %s29 = scalar_select %p26, %s27, %s28
      %p32 = pneg %p26
      %p33 = scmp.eq.s32.totalorder %s13, 1
      %p34 = por %p32, %p33
      %p35 = scmp.ne.s32.totalorder %s27, %s30
      %p36 = scmp.eq.s32.totalorder %s13, 0
      %p37 = por %p35, %p36
      %p38 = scmp.ne.s32.totalorder %s27, %s30
      %p39 = scmp.eq.s32.totalorder %s18, 1
      %p40 = por %p38, %p39
      %p41 = scmp.ne.s32.totalorder %s30, %s31
      %p42 = scmp.eq.s32.totalorder %s18, 0
      %p43 = por %p41, %p42
      %p44 = scmp.ne.s32.totalorder %s30, %s31
      %p45 = scmp.eq.s32.totalorder %s19, 1
      %p46 = por %p44, %p45
      %p48 = scmp.ne.s32.totalorder %s31, %s47
      %p49 = scmp.eq.s32.totalorder %s19, 0
      %p50 = por %p48, %p49
      %s51 = ssub.s32 %s13, %s20
      %p52 = scmp.eq.s32.totalorder %s51, 0
      %s54 = sadd.s32 %s53, 1
      %s55 = scalar_select %p52, %s53, %s54
      %p58 = pneg %p52
      %p59 = scmp.eq.s32.totalorder %s13, 1
      %p60 = por %p58, %p59
      %p61 = scmp.ne.s32.totalorder %s53, %s56
      %p62 = scmp.eq.s32.totalorder %s13, 0
      %p63 = por %p61, %p62
      %p64 = scmp.ne.s32.totalorder %s53, %s56
      %p65 = scmp.eq.s32.totalorder %s18, 1
      %p66 = por %p64, %p65
      %p67 = scmp.ne.s32.totalorder %s56, %s57
      %p68 = scmp.eq.s32.totalorder %s18, 0
      %p69 = por %p67, %p68
      %p70 = scmp.ne.s32.totalorder %s56, %s57
      %p71 = scmp.eq.s32.totalorder %s19, 1
      %p72 = por %p70, %p71
      %p74 = scmp.ne.s32.totalorder %s57, %s73
      %p75 = scmp.eq.s32.totalorder %s19, 0
      %p76 = por %p74, %p75
      %p77 = scmp.le.s32.totalorder 1, %s13
      %p78 = scmp.lt.s32.totalorder %s13, 3
      %p79 = pnand %p77, %p78
      %p80 = pneg %p79
      // Predicated region
      $region9: #{tpu_custom_call.1} parent=5 // pred_check
        _
      $region10: #{tpu_custom_call.1} parent=5 // pred_check_branch
        %82 = sbr.rel (%p79) target = $region12
      $region11: #{tpu_custom_call.1} parent=5 // pred_region
        %s83 = ssub.s32 %s13, 1
      $region12: #{tpu_custom_call.1} parent=5 // pred_fallthru
        _
      %p84 = scmp.lt.s32.totalorder %s13, 2
      // Predicated region
      $region13: #{tpu_custom_call.1} parent=5 // pred_check
        %p85 = pneg %p84
      $region14: #{tpu_custom_call.1} parent=5 // pred_check_branch
        %87 = sbr.rel (%p85) target = $region16
      $region15: #{tpu_custom_call.1} parent=5 // pred_region
        // Predicated region
        $region17: #{tpu_custom_call.1} parent=15 // pred_check
          %p88 = pneg %p37
        $region18: #{tpu_custom_call.1} parent=15 // pred_check_branch
          %90 = sbr.rel (%p88) target = $region20
        $region19: #{tpu_custom_call.1} parent=15 // pred_region
          %s91 = sand.u32 %s27, 1
          %s92 = scalar_lea.sflag [#allocation4], %s91
          %s93 = sand.u32 %s27, 1
          %s94 = smul.addr %s93, 16
          %s95 = scalar_lea.vmem [#allocation3], %s94
          %p96 = scmp.lt.s32.totalorder %s13, 0
          %s97 = scalar_select %p96, %s13, 0
          %s98 = smul.u32 8, %s97
          %s100 = ssub.s32 256, 256
          %101 = vsyncadd %s92, %s100
          %s102 = smul.addr %s98, 32
          %s103 = scalar_lea.hbm %s0, %s102
          %s105 = sshll.u32 %s95, 4
          %s106 = int_to_ptr.vmem [resolvable:$true] %s105
          %108 = dma.hbm_to_vmem [thread:$0]  %s103, 256, %s106, %s92
        $region20: #{tpu_custom_call.1} parent=15 // pred_fallthru
          _
      $region16: #{tpu_custom_call.1} parent=5 // pred_fallthru
        _
      %p109 = scmp.le.s32.totalorder 1, %s13
      %p110 = scmp.lt.s32.totalorder %s13, 3
      %p111 = pnand %p109, %p110
      %p112 = pneg %p111
      // Predicated region
      $region21: #{tpu_custom_call.1} parent=5 // pred_check
        _
      $region22: #{tpu_custom_call.1} parent=5 // pred_check_branch
        %114 = sbr.rel (%p111) target = $region24
      $region23: #{tpu_custom_call.1} parent=5 // pred_region
        %s115 = ssub.s32 %s13, 1
        %s116 = sand.u32 %s30, 1
        %s117 = scalar_lea.sflag [#allocation4], %s116
        %s118 = sand.u32 %s30, 1
        %s119 = smul.addr %s118, 16
        %s120 = scalar_lea.vmem [#allocation3], %s119
        // Predicated region
        $region25: #{tpu_custom_call.1} parent=23 // pred_check
          %p121 = pneg %p43
        $region26: #{tpu_custom_call.1} parent=23 // pred_check_branch
          %123 = sbr.rel (%p121) target = $region28
        $region27: #{tpu_custom_call.1} parent=23 // pred_region
          %124 = dma.done %s117, 256
        $region28: #{tpu_custom_call.1} parent=23 // pred_fallthru
          _
        %s125 = sand.u32 %s30, 1
        %s126 = scalar_lea.sflag [#allocation4], %s125
        %s127 = sand.u32 %s30, 1
        %s128 = smul.addr %s127, 16
        %s129 = scalar_lea.vmem [#allocation3], %s128
        %p130 = pneg %p43
        %p131 = pneg %p40
        %p132 = pneg %p69
        %p133 = pneg %p66
        %s134 = sand.u32 %s56, 1
        %s135 = scalar_lea.sflag [#allocation5], %s134
        %s136 = sand.u32 %s56, 1
        %s137 = smul.addr %s136, 16
        %s138 = scalar_lea.vmem [#allocation6], %s137
        %p139 = scmp.lt.s32.totalorder %s18, 0
        %s140 = scalar_select %p139, %s18, 0
        %s141 = smul.u32 8, %s140
        %s142 = smul.u32 8, %s18
        %s143 = ssub.s32 10, %s142
        %p144 = scmp.lt.s32.totalorder %s143, 8
        %s145 = scalar_select %p144, %s143, 8
        %s146 = smul.u32 32, %s145
        %p147 = scmp.eq.s32.totalorder %s18, 0
        // Predicated region
        $region29: #{tpu_custom_call.1} parent=23 // pred_check
          %p148 = pneg %p147
        $region30: #{tpu_custom_call.1} parent=23 // pred_check_branch
          %150 = sbr.rel (%p148) target = $region32
        $region31: #{tpu_custom_call.1} parent=23 // pred_region
          %151 = vst [vmem:[#allocation2] sm:$0x3] 0.0
        $region32: #{tpu_custom_call.1} parent=23 // pred_fallthru
          _
        %p152 = scmp.lt.s32.totalorder %s18, 1
        // Predicated region
        $region33: #{tpu_custom_call.1} parent=23 // pred_check
          %p153 = pneg %p152
        $region34: #{tpu_custom_call.1} parent=23 // pred_check_branch
          %155 = sbr.rel (%p153) target = $region36
        $region35: #{tpu_custom_call.1} parent=23 // pred_region
          %v156 = vld [vmem:[%s120] sm:$0xff]
          %v157 = vld [vmem:[%s120 + $0x8] sm:$0xff]
          %v160 = vcombine.high %v156, %v156
          %v162 = vunpack.c.l.s4 1983009808
          %v163 = vunpack.c.0.s8 %v162
          %v164 = vlaneseq
          %v165 = vshrl.u32 %v164, 7
          %v166 = vsub.s32 %v163, %v165
          %v167 = vrot.slane %v156, %v166
          %v169 = vunpack.c.l.s4 1983009808
          %v170 = vunpack.c.0.s8 %v169
          %v171 = vlaneseq
          %v172 = vshrl.u32 %v171, 7
          %v173 = vsub.s32 %v170, %v172
          %v174 = vrot.slane %v160, %v173
          %v175 = vcombine.high %v167, %v167
          %v176 = vcombine.high %v174, %v174
          %v177 = vcombine.high %v157, %v157
          %v179 = vunpack.c.l.s4 1983009808
          %v180 = vunpack.c.0.s8 %v179
          %v181 = vlaneseq
          %v182 = vshrl.u32 %v181, 7
          %v183 = vsub.s32 %v180, %v182
          %v184 = vrot.slane %v157, %v183
          %v186 = vunpack.c.l.s4 1983009808
          %v187 = vunpack.c.0.s8 %v186
          %v188 = vlaneseq
          %v189 = vshrl.u32 %v188, 7
          %v190 = vsub.s32 %v187, %v189
          %v191 = vrot.slane %v177, %v190
          %v192 = vcombine.high %v184, %v184
          %v193 = vcombine.high %v191, %v191
          %vm202 = vcmask 1041408
          %v203 = vsel %vm202, %v167, 0.0
          %v204 = vrot.slane %v203, 4
          %v205 = vadd.f32 %v203, %v204
          %v206 = vrot.slane %v205, 2
          %v207 = vadd.f32 %v205, %v206
          %v208 = vrot.slane %v207, 1
          %v209 = vadd.f32 %v207, %v208
          %v210 = vsel %vm202, %v175, 0.0
          %v211 = vrot.slane %v210, 4
          %v212 = vadd.f32 %v210, %v211
          %v213 = vrot.slane %v212, 2
          %v214 = vadd.f32 %v212, %v213
          %v215 = vrot.slane %v214, 1
          %v216 = vadd.f32 %v214, %v215
          %v217 = vsel %vm202, %v174, 0.0
          %v218 = vrot.slane %v217, 4
          %v219 = vadd.f32 %v217, %v218
          %v220 = vrot.slane %v219, 2
          %v221 = vadd.f32 %v219, %v220
          %v222 = vrot.slane %v221, 1
          %v223 = vadd.f32 %v221, %v222
          %v224 = vsel %vm202, %v176, 0.0
          %v225 = vrot.slane %v224, 4
          %v226 = vadd.f32 %v224, %v225
          %v227 = vrot.slane %v226, 2
          %v228 = vadd.f32 %v226, %v227
          %v229 = vrot.slane %v228, 1
          %v230 = vadd.f32 %v228, %v229
          %v231 = vsel %vm202, %v184, 0.0
          %v232 = vrot.slane %v231, 4
          %v233 = vadd.f32 %v231, %v232
          %v234 = vrot.slane %v233, 2
          %v235 = vadd.f32 %v233, %v234
          %v236 = vrot.slane %v235, 1
          %v237 = vadd.f32 %v235, %v236
          %v238 = vsel %vm202, %v192, 0.0
          %v239 = vrot.slane %v238, 4
          %v240 = vadd.f32 %v238, %v239
          %v241 = vrot.slane %v240, 2
          %v242 = vadd.f32 %v240, %v241
          %v243 = vrot.slane %v242, 1
          %v244 = vadd.f32 %v242, %v243
          %v245 = vsel %vm202, %v191, 0.0
          %v246 = vrot.slane %v245, 4
          %v247 = vadd.f32 %v245, %v246
          %v248 = vrot.slane %v247, 2
          %v249 = vadd.f32 %v247, %v248
          %v250 = vrot.slane %v249, 1
          %v251 = vadd.f32 %v249, %v250
          %v252 = vsel %vm202, %v193, 0.0
          %v253 = vrot.slane %v252, 4
          %v254 = vadd.f32 %v252, %v253
          %v255 = vrot.slane %v254, 2
          %v256 = vadd.f32 %v254, %v255
          %v257 = vrot.slane %v256, 1
          %v258 = vadd.f32 %v256, %v257
          %v259 = vrcp.pop 2.0
          %v260 = vmul.f32 %v209, %v259
          %v261 = vmul.f32 %v216, %v259
          %v262 = vmul.f32 %v223, %v259
          %v263 = vmul.f32 %v230, %v259
          %v264 = vmul.f32 %v237, %v259
          %v265 = vmul.f32 %v244, %v259
          %v266 = vmul.f32 %v251, %v259
          %v267 = vmul.f32 %v258, %v259
          %v276 = vcombine.low %v260, %v261
          %v277 = vcombine.low %v262, %v263
          %v279 = vunpack.c.l.s4 1983009808
          %v280 = vunpack.c.0.s8 %v279
          %v281 = vlaneseq
          %v282 = vshrl.u32 %v281, 7
          %v283 = vsub.s32 %v280, %v282
          %v284 = vrot.slane %v276, %v283
          %v286 = vunpack.c.l.s4 1983009808
          %v287 = vunpack.c.0.s8 %v286
          %v288 = vlaneseq
          %v289 = vshrl.u32 %v288, 7
          %v290 = vsub.s32 %v287, %v289
          %v291 = vrot.slane %v277, %v290
          %v292 = vcombine.low %v284, %v291
          %v293 = vcombine.low %v264, %v265
          %v294 = vcombine.low %v266, %v267
          %v296 = vunpack.c.l.s4 1983009808
          %v297 = vunpack.c.0.s8 %v296
          %v298 = vlaneseq
          %v299 = vshrl.u32 %v298, 7
          %v300 = vsub.s32 %v297, %v299
          %v301 = vrot.slane %v293, %v300
          %v303 = vunpack.c.l.s4 1983009808
          %v304 = vunpack.c.0.s8 %v303
          %v305 = vlaneseq
          %v306 = vshrl.u32 %v305, 7
          %v307 = vsub.s32 %v304, %v306
          %v308 = vrot.slane %v294, %v307
          %v309 = vcombine.low %v301, %v308
          %v312 = vsub.f32 %v156, %v292
          %v313 = vsub.f32 %v157, %v309
          %v314 = vmul.f32 %v312, %v312
          %v315 = vmul.f32 %v313, %v313
          %v316 = vadd.f32 %v314, 1e-08
          %v317 = vadd.f32 %v315, 1e-08
          %v318 = vrsqrt.pop %v316
          %v319 = vmul.f32 %v316, %v318
          %vm320 = vcmp.eq.f32.partialorder %v316, inf
          %v321 = vsel %vm320, %v316, %v319
          %vm322 = vcmp.eq.f32.partialorder %v316, 0.0
          %v323 = vand.u32 %v316, 2147483648
          %v324 = vsel %vm322, %v323, %v321
          %v325 = vrsqrt.pop %v317
          %v326 = vmul.f32 %v317, %v325
          %vm327 = vcmp.eq.f32.partialorder %v317, inf
          %v328 = vsel %vm327, %v317, %v326
          %vm329 = vcmp.eq.f32.partialorder %v317, 0.0
          %v330 = vand.u32 %v317, 2147483648
          %v331 = vsel %vm329, %v330, %v328
          %v332 = vld [vmem:[#allocation2] sm:$0x3]
          %v334 = vrot.slane %v324, 2
          %v336 = vadd.f32 %v324, %v334
          %v337 = vrot.slane %v324, 4
          %v339 = vrot.slane %v324, 6
          %v341 = vadd.f32 %v337, %v339
          %v343 = vrot.slane %v331, 2
          %v345 = vadd.f32 %v331, %v343
          %v346 = vrot.slane %v331, 4
          %v348 = vrot.slane %v331, 6
          %v350 = vadd.f32 %v346, %v348
          %v351 = vadd.f32 %v336, %v341
          %v352 = vadd.f32 %v345, %v350
          %v353 = vadd.f32 %v351, %v352
          %v354 = vadd.f32 %v332, %v353
          %355 = vst [vmem:[#allocation2] sm:$0x3] %v354
          %356 = vst [vmem:[%s138] sm:$0xff] %v156
          %357 = vst [vmem:[%s138 + $0x8] sm:$0xff] %v157
        $region36: #{tpu_custom_call.1} parent=23 // pred_fallthru
          _
        %p358 = scmp.eq.s32.totalorder %s18, 1
        // Predicated region
        $region37: #{tpu_custom_call.1} parent=23 // pred_check
          %p359 = pneg %p358
        $region38: #{tpu_custom_call.1} parent=23 // pred_check_branch
          %361 = sbr.rel (%p359) target = $region40
        $region39: #{tpu_custom_call.1} parent=23 // pred_region
          %v362 = vld [vmem:[#allocation2] sm:$0x3]
          %vm363 = vcmask 1041408
          %v364 = vsel %vm363, %v362, 0.0
          %365 = vadd.xlane.f32.xlu0 %v364
          %v366 = vpop.xlane.xlu0 %365
          %v367 = vmul.f32 %v366, 0.0009765625
          %v370 = vunpack.c.l.s4 269488144
          %v371 = vunpack.c.0.s8 %v370
          %v372 = vlaneseq
          %v373 = vshrl.u32 %v372, 7
          %v374 = vsub.s32 %v371, %v373
          %v375 = vrot.slane %v367, %v374
          %377 = vst [vmem:[%s138] sm:$0xff] %v375
          %378 = vst [vmem:[%s138 + $0x8] sm:$0xff] %v375
        $region40: #{tpu_custom_call.1} parent=23 // pred_fallthru
          _
        %s379 = sand.u32 %s56, 1
        %s380 = scalar_lea.sflag [#allocation5], %s379
        %s381 = sand.u32 %s56, 1
        %s382 = smul.addr %s381, 16
        %s383 = scalar_lea.vmem [#allocation6], %s382
        // Predicated region
        $region41: #{tpu_custom_call.1} parent=23 // pred_check
          %p384 = pneg %p66
        $region42: #{tpu_custom_call.1} parent=23 // pred_check_branch
          %386 = sbr.rel (%p384) target = $region44
        $region43: #{tpu_custom_call.1} parent=23 // pred_region
          %s387 = smul.u32 8, %s18
          %s388 = ssub.s32 10, %s387
          %p389 = scmp.lt.s32.totalorder %s388, 8
          %s390 = scalar_select %p389, %s388, 8
          %s391 = smul.u32 32, %s390
          %s393 = ssub.s32 256, %s391
          %394 = vsyncadd %s380, %s393
          %p395 = scmp.ne.s32.totalorder 0, %s391
          %s396 = smul.addr %s387, 32
          %s397 = scalar_lea.hbm %s1, %s396
          %s398 = smul.u32 %s390, 2
          %s399 = sshll.u32 %s398, 4
          %s400 = sshll.u32 %s383, 4
          %s401 = int_to_ptr.vmem [resolvable:$true] %s400
          %403 = dma.vmem_to_hbm [thread:$0]  (%p395), %s401, %s399, %s397, %s380
        $region44: #{tpu_custom_call.1} parent=23 // pred_fallthru
          _
      $region24: #{tpu_custom_call.1} parent=5 // pred_fallthru
        _
      %p404 = scmp.le.s32.totalorder 2, %s13
      // Predicated region
      $region45: #{tpu_custom_call.1} parent=5 // pred_check
        %p405 = pneg %p404
      $region46: #{tpu_custom_call.1} parent=5 // pred_check_branch
        %407 = sbr.rel (%p405) target = $region48
      $region47: #{tpu_custom_call.1} parent=5 // pred_region
        %s408 = ssub.s32 %s13, 2
        // Predicated region
        $region49: #{tpu_custom_call.1} parent=47 // pred_check
          %p409 = pneg %p72
        $region50: #{tpu_custom_call.1} parent=47 // pred_check_branch
          %411 = sbr.rel (%p409) target = $region52
        $region51: #{tpu_custom_call.1} parent=47 // pred_region
          %s412 = sand.u32 %s57, 1
          %s413 = scalar_lea.sflag [#allocation5], %s412
          %s414 = sand.u32 %s57, 1
          %s415 = smul.addr %s414, 16
          %s416 = scalar_lea.vmem [#allocation6], %s415
          %417 = dma.done %s413, 256
        $region52: #{tpu_custom_call.1} parent=47 // pred_fallthru
          _
      $region48: #{tpu_custom_call.1} parent=5 // pred_fallthru
        _
    $region6: #{tpu_custom_call.1} parent=1 // loop_footer
      %s17 = sadd.s32 1, %s13
    $region7: #{tpu_custom_call.1} parent=1 // loop_footer_branch
      %12 = sbr.rel target = $region3
    $region8: #{tpu_custom_call.1} parent=1 // loop_exit
      _
    %418 = vsyncpa [#allocation4], 1
    %s419 = scalar_lea.sflag [#allocation4], 1
    %420 = vsyncpa %s419, 1
    %421 = vsyncpa [#allocation5], 1
    %s422 = scalar_lea.sflag [#allocation5], 1
    %423 = vsyncpa %s422, 1

</llo_original>
